<compile_context>
chip_gen: v5e
topology: v5e:2x2
jax: 0.10.0
libtpu: 0.0.40
codegen_flags: <defaults>
</compile_context>

<pallas_src>
import jax
import jax.numpy as jnp
from jax import lax
from jax.experimental import pallas as pl
from jax.experimental.pallas import tpu as pltpu


def scorer_kernel(enc_ref, w_ref, b_ref, mask_ref, out_ref):
    # enc_ref:  (TM, H)  BERT encodings, native dtype (bf16/f32)
    # w_ref:    (2, H)   ans_scorer weight in nn.Linear layout, enc dtype
    # b_ref:    (2, 1)   bias, f32
    # mask_ref: (1, TM)  pointer mask (1.0 valid / 0.0 invalid), f32, lane-major
    # out_ref:  (2, TM)  masked [start; end] scores, f32, lane-dense
    #
    # Compute scores already transposed: (2, TM) = W @ enc^T using the standard
    # q@k^T contraction (both operands contract on their last dim).  The MXU
    # handles the transposed contraction natively, so the epilogue and stores
    # are lane-dense without any XLU transpose.
    scores_t = lax.dot_general(
        w_ref[...], enc_ref[...],
        dimension_numbers=(((1,), (1,)), ((), ())),
        preferred_element_type=jnp.float32)                      # (2, TM) f32
    # Exactly matches torch: scores -= (1 - mask) * 1e20 (for any float mask).
    penalty = (mask_ref[...] - 1.0) * 1e20                       # (1, TM)
    out_ref[...] = (scores_t + b_ref[...] + penalty).astype(out_ref.dtype)


def _vmem_bytes(tm, H, itemsize, nbuf):
    enc = nbuf * tm * H * itemsize            # pipelined activation tiles
    mask = 2 * tm * 4                         # (1, TM) f32, double-buffered
    out = 2 * 2 * tm * 4                      # (2, TM) f32, double-buffered
    w = 2 * 2 * H * itemsize                  # resident weight (2, H)
    return enc + mask + out + w + 4096


def ans_score_and_mask(bert_enc, pointer_mask, weight, bias, *, tm=4096, enc_buffers=2):
    """bert_enc: [B,S,H] (bf16/f32), pointer_mask: [B,S] in {0,1},
    weight: [2,H] (ans_scorer.weight, native nn.Linear layout), bias: [2].

    tm:          row-tile size (tunable; sweep ~2048-8192 per generation).
    enc_buffers: pipeline depth for activation tiles (2 = double buffer;
                 3 can help on v7x where both TensorCores contend for HBM)."""
    B, S, H = bert_enc.shape
    BS = B * S
    enc_dtype = bert_enc.dtype
    itemsize = jnp.dtype(enc_dtype).itemsize

    # NOTE: weight is downcast to the activation dtype (bf16 when BERT emits
    # bf16); accumulation is f32.  Deliberate precision choice vs the f32
    # torch nn.Linear (negligible for span scoring).
    enc2 = bert_enc.reshape(BS, H)                       # native dtype, NO pad/copy
    mask_t = pointer_mask.reshape(1, BS).astype(jnp.float32)
    w = weight.astype(enc_dtype)                         # (2, H)
    b2 = bias.reshape(2, 1).astype(jnp.float32)

    # ---- row-tile selection: no activation padding; the last (ragged) tile is
    # handled by Pallas.  Tile must be a multiple of 128 (lane dim of the
    # transposed mask/out blocks) unless it covers the whole array.  Cap so
    # enc_buffers x tile stays within a generation-safe VMEM budget.
    nbuf = max(int(enc_buffers), 2)
    enc_budget = 24 << 20                                # bytes for all enc buffers
    max_tm = max(128, (enc_budget // (nbuf * H * itemsize)) // 128 * 128)
    tm_eff = min(max(128, (int(tm) // 128) * 128), max_tm)
    if BS <= tm_eff:
        tm_eff = BS                                      # single full-array tile
    grid = (pl.cdiv(BS, tm_eff),)

    # Explicit scoped-VMEM limit: >= need + headroom, capped at 48 MiB so it is
    # safe on v7x (64 MiB physical) and raises v5e's 16 MiB scoped default.
    vmem_limit = int(min(max(_vmem_bytes(tm_eff, H, itemsize, nbuf) + (4 << 20),
                             32 << 20), 48 << 20))

    enc_kwargs = {}
    if nbuf > 2:
        enc_kwargs["pipeline_mode"] = pl.Buffered(nbuf)
    enc_spec = pl.BlockSpec((tm_eff, H), lambda i: (i, 0), **enc_kwargs)

    cost = pl.CostEstimate(
        flops=2 * BS * H * 2,
        transcendentals=0,
        bytes_accessed=(BS * H * itemsize      # activation read (dominant)
                        + BS * 4               # mask read
                        + 2 * H * itemsize     # weight (read once)
                        + 2 * BS * 4),         # scores written
    )

    out_t = pl.pallas_call(
        scorer_kernel,
        out_shape=jax.ShapeDtypeStruct((2, BS), jnp.float32),
        grid=grid,
        in_specs=[
            enc_spec,                                       # activation tile, pipelined
            pl.BlockSpec((2, H), lambda i: (0, 0)),         # weight: resident, 1 DMA
            pl.BlockSpec((2, 1), lambda i: (0, 0)),         # bias:   resident
            pl.BlockSpec((1, tm_eff), lambda i: (0, i)),    # mask tile (lane-major)
        ],
        out_specs=pl.BlockSpec((2, tm_eff), lambda i: (0, i)),  # lane-dense scores
        compiler_params=pltpu.CompilerParams(
            dimension_semantics=("parallel",),              # megacore row sharding
            vmem_limit_bytes=vmem_limit),
        cost_estimate=cost,
    )(enc2, w, b2, mask_t)

    # (2, BS) -> (B, S, 2): tiny (8*BS bytes) XLA transpose, negligible vs BS*H.
    return out_t.T.reshape(B, S, 2)


if __name__ == "__main__":
    B, S, H = 2, 8, 128  # batch, seq, bert_hidden_size (small synthetic sizes)

    key = jax.random.PRNGKey(0)
    k_enc, k_w, k_b = jax.random.split(key, 3)

    # BERT encoder output in its native (bf16) dtype — fed to the kernel as-is.
    bert_enc = jax.random.normal(k_enc, (B, S, H), dtype=jnp.float32).astype(jnp.bfloat16)
    # ans_scorer = nn.Linear(H, 2): weight in native [2, H] layout.
    weight = (jax.random.normal(k_w, (2, H), dtype=jnp.float32)
              * (1.0 / jnp.sqrt(H))).astype(jnp.bfloat16)
    bias = jax.random.normal(k_b, (2,), dtype=jnp.float32) * 0.01
    # pointer_mask: 1 for valid positions, 0 otherwise (last 2 tokens masked).
    pointer_mask = jnp.concatenate(
        [jnp.ones((B, S - 2), jnp.float32), jnp.zeros((B, 2), jnp.float32)], axis=1)

    scores = ans_score_and_mask(bert_enc, pointer_mask, weight, bias)
    scores = jax.block_until_ready(scores)

    # Reference check in plain JAX (same bf16 inputs, f32 math).
    ref = jnp.einsum("bsh,th->bst",
                     bert_enc.astype(jnp.float32),
                     weight.astype(jnp.float32)) + bias
    ref = ref - (1.0 - pointer_mask)[:, :, None] * 1e20

    assert scores.shape == (B, S, 2)
    assert jnp.allclose(scores, ref, rtol=1e-2, atol=1e-2), "mismatch vs reference"

    print("KERNEL_OK")
</pallas_src>

<mosaic_0001>
module attributes {stable_mosaic.version = 11 : i64} {
  func.func @scorer_kernel(%arg0: i32, %arg1: memref<16x128xbf16, #tpu.memory_space<vmem>>, %arg2: memref<2x128xbf16, #tpu.memory_space<vmem>>, %arg3: memref<2x1xf32, #tpu.memory_space<vmem>>, %arg4: memref<1x16xf32, #tpu.memory_space<vmem>>, %arg5: memref<2x16xf32, #tpu.memory_space<vmem>>) attributes {dimension_semantics = [#tpu.dimension_semantics<parallel>], iteration_bounds = array<i64: 1>, scalar_prefetch = 0 : i64, scratch_operands = 0 : i64, tpu.core_type = #tpu.core_type<tc>, window_params = [{transform_indices = @transform_0, window_bounds = array<i64: 16, 128>}, {pipeline_mode = #tpu.pipeline_mode<synchronous>, transform_indices = @transform_1, window_bounds = array<i64: 2, 128>}, {pipeline_mode = #tpu.pipeline_mode<synchronous>, transform_indices = @transform_2, window_bounds = array<i64: 2, 1>}, {transform_indices = @transform_3, window_bounds = array<i64: 1, 16>}, {transform_indices = @transform_4, window_bounds = array<i64: 2, 16>}]} {
    %c0 = arith.constant 0 : index
    %c0_0 = arith.constant 0 : index
    %0 = vector.load %arg2[%c0, %c0_0] : memref<2x128xbf16, #tpu.memory_space<vmem>>, vector<2x128xbf16>
    %c0_1 = arith.constant 0 : index
    %c0_2 = arith.constant 0 : index
    %1 = vector.load %arg1[%c0_1, %c0_2] : memref<16x128xbf16, #tpu.memory_space<vmem>>, vector<16x128xbf16>
    %cst = arith.constant dense<0.000000e+00> : vector<2x16xf32>
    %2 = tpu.matmul %0, %1, %cst {dimension_numbers = #tpu.dot_dimension_numbers<[1], [1], [0], [0], [0, 0, 1, 0], [], []>} : vector<2x128xbf16>, vector<16x128xbf16>, vector<2x16xf32> -> vector<2x16xf32>
    %c0_3 = arith.constant 0 : index
    %c0_4 = arith.constant 0 : index
    %3 = vector.load %arg4[%c0_3, %c0_4] : memref<1x16xf32, #tpu.memory_space<vmem>>, vector<1x16xf32>
    %cst_5 = arith.constant 1.000000e+00 : f32
    %4 = vector.broadcast %cst_5 : f32 to vector<1x16xf32>
    %5 = arith.subf %3, %4 : vector<1x16xf32>
    %cst_6 = arith.constant 1.000000e+20 : f32
    %6 = vector.broadcast %cst_6 : f32 to vector<1x16xf32>
    %7 = arith.mulf %5, %6 : vector<1x16xf32>
    %c0_7 = arith.constant 0 : index
    %c0_8 = arith.constant 0 : index
    %8 = vector.load %arg3[%c0_7, %c0_8] : memref<2x1xf32, #tpu.memory_space<vmem>>, vector<2x1xf32>
    %9 = vector.broadcast %8 : vector<2x1xf32> to vector<2x16xf32>
    %10 = arith.addf %2, %9 : vector<2x16xf32>
    %11 = vector.broadcast %7 : vector<1x16xf32> to vector<2x16xf32>
    %12 = arith.addf %10, %11 : vector<2x16xf32>
    %c0_9 = arith.constant 0 : index
    %c0_10 = arith.constant 0 : index
    %13 = vector.load %arg5[%c0_9, %c0_10] : memref<2x16xf32, #tpu.memory_space<vmem>>, vector<2x16xf32>
    tpu.vector_store %arg5[%c0_9, %c0_10], %12 {strides = array<i32>} : memref<2x16xf32, #tpu.memory_space<vmem>>, vector<2x16xf32>,
    return
  }
  func.func @transform_0(%arg0: i32) -> (i32, i32) {
    %c0_i32 = arith.constant 0 : i32
    %c0_i32_0 = arith.constant 0 : i32
    return %arg0, %c0_i32 : i32, i32
  }
  func.func @transform_1(%arg0: i32) -> (i32, i32) {
    %c0_i32 = arith.constant 0 : i32
    %c0_i32_0 = arith.constant 0 : i32
    %c0_i32_1 = arith.constant 0 : i32
    return %c0_i32, %c0_i32_0 : i32, i32
  }
  func.func @transform_2(%arg0: i32) -> (i32, i32) {
    %c0_i32 = arith.constant 0 : i32
    %c0_i32_0 = arith.constant 0 : i32
    %c0_i32_1 = arith.constant 0 : i32
    return %c0_i32, %c0_i32_0 : i32, i32
  }
  func.func @transform_3(%arg0: i32) -> (i32, i32) {
    %c0_i32 = arith.constant 0 : i32
    %c0_i32_0 = arith.constant 0 : i32
    return %c0_i32, %arg0 : i32, i32
  }
  func.func @transform_4(%arg0: i32) -> (i32, i32) {
    %c0_i32 = arith.constant 0 : i32
    %c0_i32_0 = arith.constant 0 : i32
    return %c0_i32, %arg0 : i32, i32
  }
}

</mosaic_0001>

<llo_original>
// kernel: tpu_custom_call.1
$region0: #{tpu_custom_call.1}
  #allocation0 [shape = 'u32[]', space=smem, size = 0x4, offset = 0x4, fixed_abs, tag = 'smem constant byte address 0x4 - core index']
  #allocation1 [shape = 'u32[72,128]{1,0:T(1,128)}', space=vmem, size = 0x9000, scoped, tag = 'internal scratch']
  %s0 = inlined_call_operand.hbm [shape: bf16[16,128], index: 0, kind: input, shape index: {}]
  %s1 = inlined_call_operand.vmem [shape: bf16[2,128], index: 1, kind: input, shape index: {}]
  %s2 = inlined_call_operand.vmem [shape: f32[2,1], index: 2, kind: input, shape index: {}]
  %s3 = inlined_call_operand.vmem [shape: f32[1,16], index: 3, kind: input, shape index: {}]
  %s4 = inlined_call_operand.hbm [shape: f32[2,16], index: 4, kind: output, shape index: {}]
  %s5 = sld [smem:[#allocation0]]
  $region30: #{tpu_custom_call.1} parent=0
    _
  %s7 = ssub.s32 1, %s5
  %s8 = scalar_select 0, %s7, %s5
  $region1: #{tpu_custom_call.1} parent=0
    #allocation2 [shape = 'u8[4096]{0}', space=vmem, size = 0x1000, scoped, tag = 'input window, operand 0, single buffered']
    #allocation3 [shape = 's32[1]{0}', space=sflag, size = 0x4, scoped, tag = 'scoped memory for tpu_custom_call.1']
    #allocation4 [shape = 's32[1]{0}', space=sflag, size = 0x4, scoped, tag = 'scoped memory for tpu_custom_call.1']
    #allocation5 [shape = 'u8[1024]{0}', space=vmem, size = 0x400, scoped, tag = 'output window, operand 0, single buffered']
    %9 = vsyncpa [#allocation3], 0
    %10 = vsyncpa [#allocation4], 0
    // Predicated region
    $region2: #{tpu_custom_call.1} parent=1 // pred_check
      _
    $region3: #{tpu_custom_call.1} parent=1 // pred_check_branch
      %12 = sbr.rel (0) target = $region5
    $region4: #{tpu_custom_call.1} parent=1 // pred_region
      %14 = vsyncadd [#allocation3], 0
      %s15 = sshll.u32 %s0, 4
      %s16 = int_to_ptr.hbm [resolvable:$true] %s15
      %s17 = sshll.u32 [#allocation2], 4
      %s18 = int_to_ptr.vmem [resolvable:$true] %s17
      %23 = dma.hbm_to_vmem [thread:$0]  %s16, 128, %s18, [#allocation3], 64, 64, 4
    $region5: #{tpu_custom_call.1} parent=1 // pred_fallthru
      _
    // Predicated region
    $region6: #{tpu_custom_call.1} parent=1 // pred_check
      _
    $region7: #{tpu_custom_call.1} parent=1 // pred_check_branch
      %25 = sbr.rel (0) target = $region9
    $region8: #{tpu_custom_call.1} parent=1 // pred_region
      _
    $region9: #{tpu_custom_call.1} parent=1 // pred_fallthru
      _
    // Predicated region
    $region10: #{tpu_custom_call.1} parent=1 // pred_check
      _
    $region11: #{tpu_custom_call.1} parent=1 // pred_check_branch
      %27 = sbr.rel (0) target = $region13
    $region12: #{tpu_custom_call.1} parent=1 // pred_region
      _
    $region13: #{tpu_custom_call.1} parent=1 // pred_fallthru
      _
    // Predicated region
    $region14: #{tpu_custom_call.1} parent=1 // pred_check
      _
    $region15: #{tpu_custom_call.1} parent=1 // pred_check_branch
      %29 = sbr.rel (0) target = $region17
    $region16: #{tpu_custom_call.1} parent=1 // pred_region
      _
    $region17: #{tpu_custom_call.1} parent=1 // pred_fallthru
      _
    // Predicated region
    $region18: #{tpu_custom_call.1} parent=1 // pred_check
      _
    $region19: #{tpu_custom_call.1} parent=1 // pred_check_branch
      %31 = sbr.rel (0) target = $region21
    $region20: #{tpu_custom_call.1} parent=1 // pred_region
      %33 = dma.done [#allocation3], 128
    $region21: #{tpu_custom_call.1} parent=1 // pred_fallthru
      _
    %v35 = vld [vmem:[%s1] sm:$0x1]
    %v36 = vld [vmem:[#allocation2] sm:$0xf]
    %v37 = vld [vmem:[#allocation2 + $0x4] sm:$0xf]
    %v38 = vld [vmem:[%s3] sm:$0x1]
    %v39 = vsub.f32 %v38, 1.0
    %v40 = vmul.f32 %v39, 1e+20
    %v41 = vld [vmem:[%s2] sm:$0x3]
    %43 = vset.pattern.permute.xlu0 0
    %44 = vperm.xlu0 %43, %v41
    %v45 = vpop.permute.xlu0 %44
    %v49 = vunpack.c.l.b16 %v36
    %v50 = vunpack.c.l.b16 %v37
    %v51 = vpack.c.b16 %v50, %v49
    %53 = vmatpush.bf16.xpose.msra.mxu0 0
    %54 = vmatpush.bf16.xpose.msra.mxu0 0
    %55 = vmatpush.bf16.xpose.msra.mxu0 0
    %56 = vmatpush.bf16.xpose.msra.mxu0 0
    %57 = vmatpush.bf16.xpose.msra.mxu0 0
    %58 = vmatpush.bf16.xpose.msra.mxu0 0
    %59 = vmatpush.bf16.xpose.msra.mxu0 0
    %60 = vmatpush.bf16.xpose.msra.mxu0 %v51
    %61 = vmatmul.bf16.gmra.mxu0 %v35
    %v62 = vpop.f32.mrf.mxu0
    %v63 = vadd.f32 %v45, %v62
    %v64 = vpop.f32.mrf.mxu0
    %65 = vdwg.mxu0
    %v67 = vperm.slane %v40, 0
    %v69 = vadd.f32 %v63, %v67
    %vm70 = vcmask 123904
    %71 = vst.msk [vmem:[#allocation5] sm:$0x3] %vm70, %v69
    // Predicated region
    $region22: #{tpu_custom_call.1} parent=1 // pred_check
      _
    $region23: #{tpu_custom_call.1} parent=1 // pred_check_branch
      %73 = sbr.rel (0) target = $region25
    $region24: #{tpu_custom_call.1} parent=1 // pred_region
      %75 = vsyncadd [#allocation4], 0
      %s77 = sshll.u32 [#allocation5], 4
      %s78 = int_to_ptr.vmem [resolvable:$true] %s77
      %s79 = sshll.u32 %s4, 4
      %s80 = int_to_ptr.hbm [resolvable:$true] %s79
      %82 = dma.vmem_to_hbm [thread:$0]  %s78, 32, %s80, [#allocation4]
    $region25: #{tpu_custom_call.1} parent=1 // pred_fallthru
      _
    // Predicated region
    $region26: #{tpu_custom_call.1} parent=1 // pred_check
      _
    $region27: #{tpu_custom_call.1} parent=1 // pred_check_branch
      %84 = sbr.rel (0) target = $region29
    $region28: #{tpu_custom_call.1} parent=1 // pred_region
      %86 = dma.done [#allocation4], 32
    $region29: #{tpu_custom_call.1} parent=1 // pred_fallthru
      _
    %87 = vsyncpa [#allocation3], 1
    %88 = vsyncpa [#allocation4], 1

</llo_original>
